<compile_context>
chip_gen: v7x
topology: tpu7x:2x2x1
jax: 0.10.0
libtpu: 0.0.40
codegen_flags: <defaults>
</compile_context>

<pallas_src>
import math

import jax
import jax.numpy as jnp
from jax.experimental import pallas as pl
from jax.experimental.pallas import tpu as pltpu


def _cdiv(a, b):
    return (a + b - 1) // b


def _round_up(x, m):
    return ((x + m - 1) // m) * m


def _recognition_kernel(ctx_ref, resp_ref, w_ref, b_ref, h_ref):
    # Tile shapes (all resident in VMEM):
    #   ctx_ref:  (bBg, G*E)       grouped context rows (lane-dense)
    #   resp_ref: (bBg, G*E)       grouped response rows (lane-dense)
    #   w_ref:    (2, G*E, G*2Z)   block-diag weight halves [ctx, resp], once
    #   b_ref:    (1, G*2Z)        bias tiled G times (f32), once
    #   h_ref:    (bBg, G*2Z)      lane-dense output tile (mu|logvar groups)
    h = jnp.dot(ctx_ref[...], w_ref[0], preferred_element_type=jnp.float32)
    h = h + jnp.dot(resp_ref[...], w_ref[1], preferred_element_type=jnp.float32)
    h_ref[...] = (h + b_ref[...]).astype(h_ref.dtype)


def res_recognition_forward(context_embedding, response_embedding, weight, bias,
                            *, block_b=1024, compute_dtype=jnp.bfloat16):
    """Pallas implementation of ResRecognitionModule.forward.

    Args:
      context_embedding:  (B, E) float32
      response_embedding: (B, E) float32
      weight: (2E, 2Z) float32, stored as [in_features, out_features]
              (transposed vs torch's (out, in) convention)
      bias:   (2Z,) float32
      block_b: target batch tile (rows).  Internally aligned and capped at
               ~B/2 so the grid has >=2 steps whenever possible.
      compute_dtype: dtype for the input/weight DMA & MXU matmul (f32 accum).
    Returns:
      (mu, logvar): each (B, Z) float32.
    """
    B, E = context_embedding.shape
    two_e, two_z = weight.shape
    assert two_e == 2 * E, "weight must be (2*embed_dim, 2*z_dim)"
    Z = two_z // 2

    # ---- lane-dense grouping factor ------------------------------------
    # If 2Z is not a multiple of 128, pack G batch rows per kernel row so the
    # output last dim becomes a multiple of 128 (unmasked stores, no padding).
    if two_z % 128 == 0:
        G = 1
    else:
        G = 128 // math.gcd(128, two_z)
    ge, gz = G * E, G * two_z

    # ---- batch tiling ----------------------------------------------------
    row_mult = 8 * G                                   # sublane x group
    block_b = _round_up(max(block_b, row_mult), row_mult)
    half = _round_up(_cdiv(B, 2), row_mult)            # ~B/2, aligned
    bB = min(block_b, half)                            # >=2 grid steps when B > block_b
    B_pad = _round_up(B, bB)                           # pad up, never whole-batch fallback
    grid = (B_pad // bB,)
    bBg = bB // G

    # ---- wrapper-side operand prep (fuses upstream under jit) ------------
    w_ctx = weight[:E, :].astype(compute_dtype)
    w_resp = weight[E:, :].astype(compute_dtype)
    eye_g = jnp.eye(G, dtype=compute_dtype)
    # Block-diagonal halves, stacked -> single weight operand / DMA stream.
    w_bd = jnp.stack([jnp.kron(eye_g, w_ctx), jnp.kron(eye_g, w_resp)])  # (2, GE, G2Z)
    bias_bd = jnp.tile(bias.astype(jnp.float32), G).reshape(1, gz)       # (1, G2Z)

    def prep(x):
        x = x.astype(compute_dtype)
        if B_pad != B:
            x = jnp.pad(x, ((0, B_pad - B), (0, 0)))
        return x.reshape(B_pad // G, ge)               # free row-major regroup

    ctx_g = prep(context_embedding)
    resp_g = prep(response_embedding)

    h_g = pl.pallas_call(
        _recognition_kernel,
        out_shape=jax.ShapeDtypeStruct((B_pad // G, gz), jnp.float32),
        grid=grid,
        in_specs=[
            pl.BlockSpec((bBg, ge), lambda i: (i, 0)),       # grouped context tile
            pl.BlockSpec((bBg, ge), lambda i: (i, 0)),       # grouped response tile
            pl.BlockSpec((2, ge, gz), lambda i: (0, 0, 0)),  # weights, DMA'd once
            pl.BlockSpec((1, gz), lambda i: (0, 0)),         # bias, DMA'd once
        ],
        out_specs=pl.BlockSpec((bBg, gz), lambda i: (i, 0)),
        compiler_params=pltpu.CompilerParams(
            dimension_semantics=("parallel",)),
    )(ctx_g, resp_g, w_bd, bias_bd)

    # Free row-major un-group + metadata slices in XLA.
    h = h_g.reshape(B_pad, two_z)[:B]
    return h[:, :Z], h[:, Z:]


def reference_forward(context_embedding, response_embedding, weight, bias, z_dim):
    """Pure-JAX f32 reference matching the PyTorch module."""
    h = jnp.concatenate([context_embedding, response_embedding], axis=1)
    h = h @ weight + bias
    return h[:, :z_dim], h[:, z_dim:]


if __name__ == "__main__":
    # Small shapes consistent with the module.
    batch = 2
    embed_dim = 16
    z_dim = 8

    key = jax.random.PRNGKey(0)
    k_ctx, k_resp, k_w, k_b = jax.random.split(key, 4)

    context_embedding = jax.random.normal(k_ctx, (batch, embed_dim), jnp.float32)
    response_embedding = jax.random.normal(k_resp, (batch, embed_dim), jnp.float32)

    # Deterministic nn.Linear(2E, 2Z)-style init, stored as (in, out).
    fan_in = embed_dim * 2
    bound = 1.0 / (fan_in ** 0.5)
    weight = jax.random.uniform(
        k_w, (embed_dim * 2, z_dim * 2), jnp.float32, minval=-bound, maxval=bound)
    bias = jax.random.uniform(
        k_b, (z_dim * 2,), jnp.float32, minval=-bound, maxval=bound)

    mu_ref, logvar_ref = reference_forward(
        context_embedding, response_embedding, weight, bias, z_dim)

    # --- structural correctness check: f32 compute path, tight tolerance ---
    mu_f32, logvar_f32 = res_recognition_forward(
        context_embedding, response_embedding, weight, bias,
        compute_dtype=jnp.float32)
    jax.block_until_ready((mu_f32, logvar_f32))
    assert mu_f32.shape == (batch, z_dim) and logvar_f32.shape == (batch, z_dim)
    assert jnp.allclose(mu_f32, mu_ref, atol=1e-5, rtol=1e-5)
    assert jnp.allclose(logvar_f32, logvar_ref, atol=1e-5, rtol=1e-5)

    # --- default (bf16 DMA/matmul, f32 accumulate) path ---
    mu, logvar = res_recognition_forward(
        context_embedding, response_embedding, weight, bias)
    jax.block_until_ready((mu, logvar))
    assert jnp.allclose(mu, mu_ref, atol=6e-2, rtol=6e-2)
    assert jnp.allclose(logvar, logvar_ref, atol=6e-2, rtol=6e-2)

    # --- batched path: exercises multi-step grid (>=2 steps, padded/parallel) ---
    big_b = 512
    k_ctx2, k_resp2 = jax.random.split(jax.random.PRNGKey(1), 2)
    ctx_big = jax.random.normal(k_ctx2, (big_b, embed_dim), jnp.float32)
    resp_big = jax.random.normal(k_resp2, (big_b, embed_dim), jnp.float32)

    mu_b, logvar_b = res_recognition_forward(ctx_big, resp_big, weight, bias)
    jax.block_until_ready((mu_b, logvar_b))

    mu_b_ref, logvar_b_ref = reference_forward(
        ctx_big, resp_big, weight, bias, z_dim)
    assert jnp.allclose(mu_b, mu_b_ref, atol=6e-2, rtol=6e-2)
    assert jnp.allclose(logvar_b, logvar_b_ref, atol=6e-2, rtol=6e-2)

    print("KERNEL_OK")
</pallas_src>

<mosaic_0001>
module attributes {stable_mosaic.version = 11 : i64} {
  func.func @_recognition_kernel(%arg0: i32, %arg1: memref<8x128xf32, #tpu.memory_space<vmem>>, %arg2: memref<8x128xf32, #tpu.memory_space<vmem>>, %arg3: memref<2x128x128xf32, #tpu.memory_space<vmem>>, %arg4: memref<1x128xf32, #tpu.memory_space<vmem>>, %arg5: memref<8x128xf32, #tpu.memory_space<vmem>>) attributes {dimension_semantics = [#tpu.dimension_semantics<parallel>], iteration_bounds = array<i64: 1>, scalar_prefetch = 0 : i64, scratch_operands = 0 : i64, tpu.core_type = #tpu.core_type<tc>, window_params = [{transform_indices = @transform_0, window_bounds = array<i64: 8, 128>}, {transform_indices = @transform_1, window_bounds = array<i64: 8, 128>}, {pipeline_mode = #tpu.pipeline_mode<synchronous>, transform_indices = @transform_2, window_bounds = array<i64: 2, 128, 128>}, {pipeline_mode = #tpu.pipeline_mode<synchronous>, transform_indices = @transform_3, window_bounds = array<i64: 1, 128>}, {transform_indices = @transform_4, window_bounds = array<i64: 8, 128>}]} {
    %c0 = arith.constant 0 : index
    %c0_0 = arith.constant 0 : index
    %0 = vector.load %arg1[%c0, %c0_0] : memref<8x128xf32, #tpu.memory_space<vmem>>, vector<8x128xf32>
    %c0_1 = arith.constant 0 : index
    %c0_2 = arith.constant 0 : index
    %c0_3 = arith.constant 0 : index
    %1 = vector.load %arg3[%c0_1, %c0_2, %c0_3] : memref<2x128x128xf32, #tpu.memory_space<vmem>>, vector<1x128x128xf32>
    %2 = vector.shape_cast %1 : vector<1x128x128xf32> to vector<128x128xf32>
    %cst = arith.constant dense<0.000000e+00> : vector<8x128xf32>
    %3 = tpu.matmul %0, %2, %cst {dimension_numbers = #tpu.dot_dimension_numbers<[1], [0], [0], [1], [0, 0, 1, 1], [], []>} : vector<8x128xf32>, vector<128x128xf32>, vector<8x128xf32> -> vector<8x128xf32>
    %c0_4 = arith.constant 0 : index
    %c0_5 = arith.constant 0 : index
    %4 = vector.load %arg2[%c0_4, %c0_5] : memref<8x128xf32, #tpu.memory_space<vmem>>, vector<8x128xf32>
    %c1 = arith.constant 1 : index
    %c0_6 = arith.constant 0 : index
    %c0_7 = arith.constant 0 : index
    %5 = vector.load %arg3[%c1, %c0_6, %c0_7] : memref<2x128x128xf32, #tpu.memory_space<vmem>>, vector<1x128x128xf32>
    %6 = vector.shape_cast %5 : vector<1x128x128xf32> to vector<128x128xf32>
    %cst_8 = arith.constant dense<0.000000e+00> : vector<8x128xf32>
    %7 = tpu.matmul %4, %6, %cst_8 {dimension_numbers = #tpu.dot_dimension_numbers<[1], [0], [0], [1], [0, 0, 1, 1], [], []>} : vector<8x128xf32>, vector<128x128xf32>, vector<8x128xf32> -> vector<8x128xf32>
    %8 = arith.addf %3, %7 : vector<8x128xf32>
    %c0_9 = arith.constant 0 : index
    %c0_10 = arith.constant 0 : index
    %9 = vector.load %arg4[%c0_9, %c0_10] : memref<1x128xf32, #tpu.memory_space<vmem>>, vector<1x128xf32>
    %10 = vector.broadcast %9 : vector<1x128xf32> to vector<8x128xf32>
    %11 = arith.addf %8, %10 : vector<8x128xf32>
    %c0_11 = arith.constant 0 : index
    %c0_12 = arith.constant 0 : index
    %12 = vector.load %arg5[%c0_11, %c0_12] : memref<8x128xf32, #tpu.memory_space<vmem>>, vector<8x128xf32>
    tpu.vector_store %arg5[%c0_11, %c0_12], %11 {strides = array<i32>} : memref<8x128xf32, #tpu.memory_space<vmem>>, vector<8x128xf32>,
    return
  }
  func.func @transform_0(%arg0: i32) -> (i32, i32) {
    %c0_i32 = arith.constant 0 : i32
    %c0_i32_0 = arith.constant 0 : i32
    return %arg0, %c0_i32 : i32, i32
  }
  func.func @transform_1(%arg0: i32) -> (i32, i32) {
    %c0_i32 = arith.constant 0 : i32
    %c0_i32_0 = arith.constant 0 : i32
    return %arg0, %c0_i32 : i32, i32
  }
  func.func @transform_2(%arg0: i32) -> (i32, i32, i32) {
    %c0_i32 = arith.constant 0 : i32
    %c0_i32_0 = arith.constant 0 : i32
    %c0_i32_1 = arith.constant 0 : i32
    %c0_i32_2 = arith.constant 0 : i32
    return %c0_i32, %c0_i32_0, %c0_i32_1 : i32, i32, i32
  }
  func.func @transform_3(%arg0: i32) -> (i32, i32) {
    %c0_i32 = arith.constant 0 : i32
    %c0_i32_0 = arith.constant 0 : i32
    %c0_i32_1 = arith.constant 0 : i32
    return %c0_i32, %c0_i32_0 : i32, i32
  }
  func.func @transform_4(%arg0: i32) -> (i32, i32) {
    %c0_i32 = arith.constant 0 : i32
    %c0_i32_0 = arith.constant 0 : i32
    return %arg0, %c0_i32 : i32, i32
  }
}

</mosaic_0001>

<llo_original>
// kernel: tpu_custom_call.1
$region0: #{tpu_custom_call.1}
  #allocation0 [shape = 'u32[]', space=smem, size = 0x4, offset = 0x4, fixed_abs, tag = 'smem constant byte address 0x4 - core index']
  #allocation1 [shape = 'u32[144,128]{1,0:T(1,128)}', space=vmem, size = 0x12000, scoped, tag = 'internal scratch']
  %s0 = inlined_call_operand.hbm [shape: f32[8,128], index: 0, kind: input, shape index: {}]
  %s1 = inlined_call_operand.hbm [shape: f32[8,128], index: 1, kind: input, shape index: {}]
  %s2 = inlined_call_operand.hbm [shape: f32[2,128,128], index: 2, kind: input, shape index: {}]
  %s3 = inlined_call_operand.vmem [shape: f32[1,128], index: 3, kind: input, shape index: {}]
  %s4 = inlined_call_operand.hbm [shape: f32[8,128], index: 4, kind: output, shape index: {}]
  %s5 = sld [smem:[#allocation0]]
  $region38: #{tpu_custom_call.1} parent=0
    _
  %s7 = ssub.s32 1, %s5
  %s8 = scalar_select 0, %s7, %s5
  $region1: #{tpu_custom_call.1} parent=0
    #allocation2 [shape = 'u8[4096]{0}', space=vmem, size = 0x1000, scoped, tag = 'input window, operand 0, single buffered']
    #allocation3 [shape = 's32[1]{0}', space=sflag, size = 0x4, scoped, tag = 'scoped memory for tpu_custom_call.1']
    #allocation4 [shape = 's32[1]{0}', space=sflag, size = 0x4, scoped, tag = 'scoped memory for tpu_custom_call.1']
    #allocation5 [shape = 'u8[4096]{0}', space=vmem, size = 0x1000, scoped, tag = 'input window, operand 1, single buffered']
    #allocation6 [shape = 's32[1]{0}', space=sflag, size = 0x4, scoped, tag = 'scoped memory for tpu_custom_call.1']
    #allocation7 [shape = 'u8[131072]{0}', space=vmem, size = 0x20000, scoped, tag = 'input window, operand 2, single buffered']
    #allocation8 [shape = 'u8[4096]{0}', space=vmem, size = 0x1000, scoped, tag = 'output window, operand 0, single buffered']
    %9 = vsyncpa [#allocation3], 0
    %10 = vsyncpa [#allocation6], 0
    %11 = vsyncpa [#allocation4], 0
    // Predicated region
    $region2: #{tpu_custom_call.1} parent=1 // pred_check
      _
    $region3: #{tpu_custom_call.1} parent=1 // pred_check_branch
      %13 = sbr.rel (0) target = $region5
    $region4: #{tpu_custom_call.1} parent=1 // pred_region
      %s15 = ssub.s32 128, 128
      %16 = vsyncadd [#allocation3], %s15
      %s18 = sshll.u32 [#allocation2], 4
      %s19 = int_to_ptr.vmem [resolvable:$true] %s18
      %21 = dma.hbm_to_vmem [thread:$0]  %s0, 128, %s19, [#allocation3]
    $region5: #{tpu_custom_call.1} parent=1 // pred_fallthru
      _
    // Predicated region
    $region6: #{tpu_custom_call.1} parent=1 // pred_check
      _
    $region7: #{tpu_custom_call.1} parent=1 // pred_check_branch
      %23 = sbr.rel (0) target = $region9
    $region8: #{tpu_custom_call.1} parent=1 // pred_region
      %s25 = ssub.s32 128, 128
      %26 = vsyncadd [#allocation6], %s25
      %s28 = sshll.u32 [#allocation5], 4
      %s29 = int_to_ptr.vmem [resolvable:$true] %s28
      %31 = dma.hbm_to_vmem [thread:$0]  %s1, 128, %s29, [#allocation6]
    $region9: #{tpu_custom_call.1} parent=1 // pred_fallthru
      _
    // Predicated region
    $region10: #{tpu_custom_call.1} parent=1 // pred_check
      _
    $region11: #{tpu_custom_call.1} parent=1 // pred_check_branch
      %33 = sbr.rel (0) target = $region13
    $region12: #{tpu_custom_call.1} parent=1 // pred_region
      %s35 = ssub.s32 4096, 4096
      %36 = vsyncadd [#allocation6], %s35
      %s37 = sshll.u32 [#allocation7], 4
      %s38 = int_to_ptr.vmem [resolvable:$true] %s37
      %43 = dma.hbm_to_vmem [thread:$0]  %s2, 4096, %s38, [#allocation6], 128, 128, 8
    $region13: #{tpu_custom_call.1} parent=1 // pred_fallthru
      _
    // Predicated region
    $region14: #{tpu_custom_call.1} parent=1 // pred_check
      _
    $region15: #{tpu_custom_call.1} parent=1 // pred_check_branch
      %45 = sbr.rel (0) target = $region17
    $region16: #{tpu_custom_call.1} parent=1 // pred_region
      _
    $region17: #{tpu_custom_call.1} parent=1 // pred_fallthru
      _
    // Predicated region
    $region18: #{tpu_custom_call.1} parent=1 // pred_check
      _
    $region19: #{tpu_custom_call.1} parent=1 // pred_check_branch
      %47 = sbr.rel (0) target = $region21
    $region20: #{tpu_custom_call.1} parent=1 // pred_region
      %48 = dma.done [#allocation3], 128
    $region21: #{tpu_custom_call.1} parent=1 // pred_fallthru
      _
    // Predicated region
    $region22: #{tpu_custom_call.1} parent=1 // pred_check
      _
    $region23: #{tpu_custom_call.1} parent=1 // pred_check_branch
      %50 = sbr.rel (0) target = $region25
    $region24: #{tpu_custom_call.1} parent=1 // pred_region
      %51 = dma.done [#allocation6], 128
    $region25: #{tpu_custom_call.1} parent=1 // pred_fallthru
      _
    // Predicated region
    $region26: #{tpu_custom_call.1} parent=1 // pred_check
      _
    $region27: #{tpu_custom_call.1} parent=1 // pred_check_branch
      %53 = sbr.rel (0) target = $region29
    $region28: #{tpu_custom_call.1} parent=1 // pred_region
      %54 = dma.done [#allocation6], 4096
    $region29: #{tpu_custom_call.1} parent=1 // pred_fallthru
      _
    %v55 = vld [vmem:[#allocation2] sm:$0xff]
    %v56 = vld [vmem:[#allocation7] sm:$0xff]
    %v57 = vld [vmem:[#allocation7 + $0x8] sm:$0xff]
    %v58 = vld [vmem:[#allocation7 + $0x10] sm:$0xff]
    %v59 = vld [vmem:[#allocation7 + $0x18] sm:$0xff]
    %v60 = vld [vmem:[#allocation7 + $0x20] sm:$0xff]
    %v61 = vld [vmem:[#allocation7 + $0x28] sm:$0xff]
    %v62 = vld [vmem:[#allocation7 + $0x30] sm:$0xff]
    %v63 = vld [vmem:[#allocation7 + $0x38] sm:$0xff]
    %v64 = vld [vmem:[#allocation7 + $0x40] sm:$0xff]
    %v65 = vld [vmem:[#allocation7 + $0x48] sm:$0xff]
    %v66 = vld [vmem:[#allocation7 + $0x50] sm:$0xff]
    %v67 = vld [vmem:[#allocation7 + $0x58] sm:$0xff]
    %v68 = vld [vmem:[#allocation7 + $0x60] sm:$0xff]
    %v69 = vld [vmem:[#allocation7 + $0x68] sm:$0xff]
    %v70 = vld [vmem:[#allocation7 + $0x70] sm:$0xff]
    %v71 = vld [vmem:[#allocation7 + $0x78] sm:$0xff]
    %v72 = vld [vmem:[#allocation5] sm:$0xff]
    %s73 = scalar_lea.vmem [#allocation7], 128
    %v74 = vld [vmem:[%s73] sm:$0xff]
    %v75 = vld [vmem:[%s73 + $0x8] sm:$0xff]
    %v76 = vld [vmem:[%s73 + $0x10] sm:$0xff]
    %v77 = vld [vmem:[%s73 + $0x18] sm:$0xff]
    %v78 = vld [vmem:[%s73 + $0x20] sm:$0xff]
    %v79 = vld [vmem:[%s73 + $0x28] sm:$0xff]
    %v80 = vld [vmem:[%s73 + $0x30] sm:$0xff]
    %v81 = vld [vmem:[%s73 + $0x38] sm:$0xff]
    %v82 = vld [vmem:[%s73 + $0x40] sm:$0xff]
    %v83 = vld [vmem:[%s73 + $0x48] sm:$0xff]
    %v84 = vld [vmem:[%s73 + $0x50] sm:$0xff]
    %v85 = vld [vmem:[%s73 + $0x58] sm:$0xff]
    %v86 = vld [vmem:[%s73 + $0x60] sm:$0xff]
    %v87 = vld [vmem:[%s73 + $0x68] sm:$0xff]
    %v88 = vld [vmem:[%s73 + $0x70] sm:$0xff]
    %v89 = vld [vmem:[%s73 + $0x78] sm:$0xff]
    %90 = vmatprep.subr.mxu0 0.0
    %91 = vmatpush1.msra.mxu0 %v74
    %92 = vmatprep.subr.mxu0 0.0
    %93 = vmatpush1.msra.mxu0 %v75
    %94 = vmatprep.subr.mxu0 0.0
    %95 = vmatpush1.msra.mxu0 %v76
    %96 = vmatprep.subr.mxu0 0.0
    %97 = vmatpush1.msra.mxu0 %v77
    %98 = vmatprep.subr.mxu0 0.0
    %99 = vmatpush1.msra.mxu0 %v78
    %100 = vmatprep.subr.mxu0 0.0
    %101 = vmatpush1.msra.mxu0 %v79
    %102 = vmatprep.subr.mxu0 0.0
    %103 = vmatpush1.msra.mxu0 %v80
    %104 = vmatprep.subr.mxu0 0.0
    %105 = vmatpush1.msra.mxu0 %v81
    %106 = vmatprep.subr.mxu0 0.0
    %107 = vmatpush1.msra.mxu0 %v82
    %108 = vmatprep.subr.mxu0 0.0
    %109 = vmatpush1.msra.mxu0 %v83
    %110 = vmatprep.subr.mxu0 0.0
    %111 = vmatpush1.msra.mxu0 %v84
    %112 = vmatprep.subr.mxu0 0.0
    %113 = vmatpush1.msra.mxu0 %v85
    %114 = vmatprep.subr.mxu0 0.0
    %115 = vmatpush1.msra.mxu0 %v86
    %116 = vmatprep.subr.mxu0 0.0
    %117 = vmatpush1.msra.mxu0 %v87
    %118 = vmatprep.subr.mxu0 0.0
    %119 = vmatpush1.msra.mxu0 %v88
    %120 = vmatprep.subr.mxu0 0.0
    %121 = vmatpush1.msra.mxu0 %v89
    %122 = vmatprep.subr.mxu0 0.0
    %123 = vmatpush1.msra.mxu0 0.0
    %124 = vmatprep.subr.mxu0 0.0
    %125 = vmatpush1.msra.mxu0 0.0
    %126 = vmatprep.subr.mxu0 0.0
    %127 = vmatpush1.msra.mxu0 0.0
    %128 = vmatprep.subr.mxu0 0.0
    %129 = vmatpush1.msra.mxu0 0.0
    %130 = vmatprep.subr.mxu0 0.0
    %131 = vmatpush1.msra.mxu0 0.0
    %132 = vmatprep.subr.mxu0 0.0
    %133 = vmatpush1.msra.mxu0 0.0
    %134 = vmatprep.subr.mxu0 0.0
    %135 = vmatpush1.msra.mxu0 0.0
    %136 = vmatprep.subr.mxu0 0.0
    %137 = vmatpush1.msra.mxu0 0.0
    %138 = vmatprep.subr.mxu0 0.0
    %139 = vmatpush1.msra.mxu0 0.0
    %140 = vmatprep.subr.mxu0 0.0
    %141 = vmatpush1.msra.mxu0 0.0
    %142 = vmatprep.subr.mxu0 0.0
    %143 = vmatpush1.msra.mxu0 0.0
    %144 = vmatprep.subr.mxu0 0.0
    %145 = vmatpush1.msra.mxu0 0.0
    %146 = vmatprep.subr.mxu0 0.0
    %147 = vmatpush1.msra.mxu0 0.0
    %148 = vmatprep.subr.mxu0 0.0
    %149 = vmatpush1.msra.mxu0 0.0
    %150 = vmatprep.subr.mxu0 0.0
    %151 = vmatpush1.msra.mxu0 0.0
    %152 = vmatprep.subr.mxu0 0.0
    %153 = vmatpush1.msra.mxu0 0.0
    %154 = vmatprep.mubr.f32.mxu0 0.0
    %155 = vmatmul.mubr.f32.gmra.mrb[0].mxu0 %v72
    %v156 = vpop.f32.mrb[0].mxu0
    %v157 = vadd.f32 0.0, %v156
    %v158 = vpop.f32.mrb[0].mxu0
    %159 = vdwg.mxu0
    %160 = vmatprep.subr.mxu0 0.0
    %161 = vmatpush1.msra.mxu0 %v56
    %162 = vmatprep.subr.mxu0 0.0
    %163 = vmatpush1.msra.mxu0 %v57
    %164 = vmatprep.subr.mxu0 0.0
    %165 = vmatpush1.msra.mxu0 %v58
    %166 = vmatprep.subr.mxu0 0.0
    %167 = vmatpush1.msra.mxu0 %v59
    %168 = vmatprep.subr.mxu0 0.0
    %169 = vmatpush1.msra.mxu0 %v60
    %170 = vmatprep.subr.mxu0 0.0
    %171 = vmatpush1.msra.mxu0 %v61
    %172 = vmatprep.subr.mxu0 0.0
    %173 = vmatpush1.msra.mxu0 %v62
    %174 = vmatprep.subr.mxu0 0.0
    %175 = vmatpush1.msra.mxu0 %v63
    %176 = vmatprep.subr.mxu0 0.0
    %177 = vmatpush1.msra.mxu0 %v64
    %178 = vmatprep.subr.mxu0 0.0
    %179 = vmatpush1.msra.mxu0 %v65
    %180 = vmatprep.subr.mxu0 0.0
    %181 = vmatpush1.msra.mxu0 %v66
    %182 = vmatprep.subr.mxu0 0.0
    %183 = vmatpush1.msra.mxu0 %v67
    %184 = vmatprep.subr.mxu0 0.0
    %185 = vmatpush1.msra.mxu0 %v68
    %186 = vmatprep.subr.mxu0 0.0
    %187 = vmatpush1.msra.mxu0 %v69
    %188 = vmatprep.subr.mxu0 0.0
    %189 = vmatpush1.msra.mxu0 %v70
    %190 = vmatprep.subr.mxu0 0.0
    %191 = vmatpush1.msra.mxu0 %v71
    %192 = vmatprep.subr.mxu0 0.0
    %193 = vmatpush1.msra.mxu0 0.0
    %194 = vmatprep.subr.mxu0 0.0
    %195 = vmatpush1.msra.mxu0 0.0
    %196 = vmatprep.subr.mxu0 0.0
    %197 = vmatpush1.msra.mxu0 0.0
    %198 = vmatprep.subr.mxu0 0.0
    %199 = vmatpush1.msra.mxu0 0.0
    %200 = vmatprep.subr.mxu0 0.0
    %201 = vmatpush1.msra.mxu0 0.0
    %202 = vmatprep.subr.mxu0 0.0
    %203 = vmatpush1.msra.mxu0 0.0
    %204 = vmatprep.subr.mxu0 0.0
    %205 = vmatpush1.msra.mxu0 0.0
    %206 = vmatprep.subr.mxu0 0.0
    %207 = vmatpush1.msra.mxu0 0.0
    %208 = vmatprep.subr.mxu0 0.0
    %209 = vmatpush1.msra.mxu0 0.0
    %210 = vmatprep.subr.mxu0 0.0
    %211 = vmatpush1.msra.mxu0 0.0
    %212 = vmatprep.subr.mxu0 0.0
    %213 = vmatpush1.msra.mxu0 0.0
    %214 = vmatprep.subr.mxu0 0.0
    %215 = vmatpush1.msra.mxu0 0.0
    %216 = vmatprep.subr.mxu0 0.0
    %217 = vmatpush1.msra.mxu0 0.0
    %218 = vmatprep.subr.mxu0 0.0
    %219 = vmatpush1.msra.mxu0 0.0
    %220 = vmatprep.subr.mxu0 0.0
    %221 = vmatpush1.msra.mxu0 0.0
    %222 = vmatprep.subr.mxu0 0.0
    %223 = vmatpush1.msra.mxu0 0.0
    %224 = vmatprep.mubr.f32.mxu0 0.0
    %225 = vmatmul.mubr.f32.gmra.mrb[0].mxu0 %v55
    %v226 = vpop.f32.mrb[0].mxu0
    %v227 = vadd.f32 %v157, %v226
    %v228 = vpop.f32.mrb[0].mxu0
    %229 = vdwg.mxu0
    %v230 = vld [vmem:[%s3] sm:$0x1]
    %v232 = vlaneseq
    %v233 = vshrl.u32 %v232, 7
    %v234 = vsub.s32 0, %v233
    %v235 = vrot.slane %v230, %v234
    %v237 = vadd.f32 %v227, %v235
    %238 = vst [vmem:[#allocation8] sm:$0xff] %v237
    // Predicated region
    $region30: #{tpu_custom_call.1} parent=1 // pred_check
      _
    $region31: #{tpu_custom_call.1} parent=1 // pred_check_branch
      %240 = sbr.rel (0) target = $region33
    $region32: #{tpu_custom_call.1} parent=1 // pred_region
      %s242 = ssub.s32 128, 128
      %243 = vsyncadd [#allocation4], %s242
      %s245 = sshll.u32 [#allocation8], 4
      %s246 = int_to_ptr.vmem [resolvable:$true] %s245
      %248 = dma.vmem_to_hbm [thread:$0]  %s246, 128, %s4, [#allocation4]
    $region33: #{tpu_custom_call.1} parent=1 // pred_fallthru
      _
    // Predicated region
    $region34: #{tpu_custom_call.1} parent=1 // pred_check
      _
    $region35: #{tpu_custom_call.1} parent=1 // pred_check_branch
      %250 = sbr.rel (0) target = $region37
    $region36: #{tpu_custom_call.1} parent=1 // pred_region
      %251 = dma.done [#allocation4], 128
    $region37: #{tpu_custom_call.1} parent=1 // pred_fallthru
      _
    %252 = vsyncpa [#allocation3], 1
    %253 = vsyncpa [#allocation6], 1
    %254 = vsyncpa [#allocation4], 1

</llo_original>
